<compile_context>
chip_gen: v7x
topology: tpu7x:2x2x1
jax: 0.10.0
libtpu: 0.0.40
codegen_flags: <defaults>
</compile_context>

<pallas_src>
import jax
import jax.numpy as jnp
from jax.experimental import pallas as pl
from jax.experimental.pallas import tpu as pltpu


def bert_image_pooler_kernel(x_ref, w_ref, b_ref, o_ref):
    # x_ref: [tm, H] bf16   w_ref: [H, BI] bf16   b_ref: [1, BI] f32   o_ref: [tm, BI]
    acc = jnp.dot(x_ref[...], w_ref[...], preferred_element_type=jnp.float32)
    acc = acc + b_ref[...]          # bias broadcast over rows (f32, VPU)
    acc = jnp.maximum(acc, 0.0)     # ReLU (VPU)
    o_ref[...] = acc.astype(o_ref.dtype)


def _round_up(x, m):
    return ((x + m - 1) // m) * m


def bert_image_pooler(hidden_states, w, b, *, tm=256):
    """hidden_states: [B, S, v_hidden], w: [v_hidden, bi_hidden], b: [bi_hidden]."""
    B, S, Hv = hidden_states.shape
    Hw, BI = w.shape
    assert Hv == Hw, (Hv, Hw)
    out_dtype = hidden_states.dtype

    # First-token select: pure indexing (no compute), done wrapper-side so the kernel
    # only DMAs the rows it actually needs.
    x = hidden_states[:, 0, :]                       # [B, Hv]

    # Row tiling: keep tm a multiple of 8 sublanes; don't pad tiny batches up to 256.
    tm = max(8, min(_round_up(tm, 8), _round_up(B, 8)))
    m_pad = pl.cdiv(B, tm) * tm
    if m_pad != B:
        x = jnp.pad(x, ((0, m_pad - B), (0, 0)))

    # bf16 operands for the MXU; f32 accumulation happens inside the kernel.
    x_bf = x.astype(jnp.bfloat16)
    w_bf = w.astype(jnp.bfloat16)
    b2 = b.reshape(1, BI).astype(jnp.float32)

    grid = (m_pad // tm,)

    # VMEM budget (bytes), assuming double buffering of every operand/output, 2x headroom.
    out_bytes = jnp.dtype(out_dtype).itemsize
    footprint = (2 * (tm * Hv * 2)        # activation tile (bf16)
                 + 2 * (Hw * BI * 2)      # weight (bf16)
                 + 2 * (1 * BI * 4)       # bias (f32)
                 + 2 * (tm * BI * out_bytes))
    vmem_limit = int(min(64 * 1024 * 1024, max(32 * 1024 * 1024, 2 * footprint)))

    cost = pl.CostEstimate(
        flops=2 * m_pad * Hv * BI,
        transcendentals=0,
        bytes_accessed=m_pad * Hv * 2 + Hw * BI * 2 + BI * 4 + m_pad * BI * out_bytes,
    )

    out = pl.pallas_call(
        bert_image_pooler_kernel,
        out_shape=jax.ShapeDtypeStruct((m_pad, BI), out_dtype),
        grid_spec=pltpu.PrefetchScalarGridSpec(
            num_scalar_prefetch=0,
            grid=grid,
            in_specs=[
                pl.BlockSpec((tm, Hv), lambda i: (i, 0)),   # activation row tile
                pl.BlockSpec((Hw, BI), lambda i: (0, 0)),   # dense weight (grid-invariant)
                pl.BlockSpec((1, BI), lambda i: (0, 0)),    # dense bias   (grid-invariant)
            ],
            out_specs=pl.BlockSpec((tm, BI), lambda i: (i, 0)),
        ),
        compiler_params=pltpu.CompilerParams(
            dimension_semantics=("parallel",),
            vmem_limit_bytes=vmem_limit,
        ),
        cost_estimate=cost,
    )(x_bf, w_bf, b2)

    return out[:B]


def reference(hidden_states, w, b):
    x = hidden_states[:, 0, :]
    return jnp.maximum(x @ w + b, 0.0)


if __name__ == "__main__":
    # Small config consistent with the module: batch=2, seq (image regions)=8,
    # v_hidden_size=32, bi_hidden_size=32.
    batch, seq = 2, 8
    v_hidden_size, bi_hidden_size = 32, 32

    key = jax.random.PRNGKey(0)
    k1, k2, k3 = jax.random.split(key, 3)

    hidden_states = jax.random.normal(k1, (batch, seq, v_hidden_size), dtype=jnp.float32)
    # Linear params, weight stored pre-transposed as [in, out].
    w = 0.02 * jax.random.normal(k2, (v_hidden_size, bi_hidden_size), dtype=jnp.float32)
    b = 0.01 * jax.random.normal(k3, (bi_hidden_size,), dtype=jnp.float32)

    out = bert_image_pooler(hidden_states, w, b)
    out = jax.block_until_ready(out)

    ref = reference(hidden_states, w, b)
    assert out.shape == (batch, bi_hidden_size), out.shape
    # bf16 MXU operands -> slightly looser tolerance than a pure-f32 matmul.
    assert jnp.allclose(out, ref, atol=1e-2, rtol=1e-2), "mismatch vs reference"

    print("KERNEL_OK")
</pallas_src>

<mosaic_0001>
module attributes {stable_mosaic.version = 11 : i64} {
  func.func @bert_image_pooler_kernel(%arg0: i32, %arg1: memref<8x32xbf16, #tpu.memory_space<vmem>>, %arg2: memref<32x32xbf16, #tpu.memory_space<vmem>>, %arg3: memref<1x32xf32, #tpu.memory_space<vmem>>, %arg4: memref<8x32xf32, #tpu.memory_space<vmem>>) attributes {dimension_semantics = [#tpu.dimension_semantics<parallel>], iteration_bounds = array<i64: 1>, scalar_prefetch = 0 : i64, scratch_operands = 0 : i64, tpu.core_type = #tpu.core_type<tc>, window_params = [{transform_indices = @transform_0, window_bounds = array<i64: 8, 32>}, {pipeline_mode = #tpu.pipeline_mode<synchronous>, transform_indices = @transform_1, window_bounds = array<i64: 32, 32>}, {pipeline_mode = #tpu.pipeline_mode<synchronous>, transform_indices = @transform_2, window_bounds = array<i64: 1, 32>}, {transform_indices = @transform_3, window_bounds = array<i64: 8, 32>}]} {
    %c0 = arith.constant 0 : index
    %c0_0 = arith.constant 0 : index
    %0 = vector.load %arg1[%c0, %c0_0] : memref<8x32xbf16, #tpu.memory_space<vmem>>, vector<8x32xbf16>
    %c0_1 = arith.constant 0 : index
    %c0_2 = arith.constant 0 : index
    %1 = vector.load %arg2[%c0_1, %c0_2] : memref<32x32xbf16, #tpu.memory_space<vmem>>, vector<32x32xbf16>
    %cst = arith.constant dense<0.000000e+00> : vector<8x32xf32>
    %2 = tpu.matmul %0, %1, %cst {dimension_numbers = #tpu.dot_dimension_numbers<[1], [0], [0], [1], [0, 0, 1, 1], [], []>} : vector<8x32xbf16>, vector<32x32xbf16>, vector<8x32xf32> -> vector<8x32xf32>
    %c0_3 = arith.constant 0 : index
    %c0_4 = arith.constant 0 : index
    %3 = vector.load %arg3[%c0_3, %c0_4] : memref<1x32xf32, #tpu.memory_space<vmem>>, vector<1x32xf32>
    %4 = vector.broadcast %3 : vector<1x32xf32> to vector<8x32xf32>
    %5 = arith.addf %2, %4 : vector<8x32xf32>
    %cst_5 = arith.constant 0.000000e+00 : f32
    %6 = vector.broadcast %cst_5 : f32 to vector<8x32xf32>
    %7 = arith.maximumf %5, %6 : vector<8x32xf32>
    %c0_6 = arith.constant 0 : index
    %c0_7 = arith.constant 0 : index
    %8 = vector.load %arg4[%c0_6, %c0_7] : memref<8x32xf32, #tpu.memory_space<vmem>>, vector<8x32xf32>
    tpu.vector_store %arg4[%c0_6, %c0_7], %7 {strides = array<i32>} : memref<8x32xf32, #tpu.memory_space<vmem>>, vector<8x32xf32>,
    return
  }
  func.func @transform_0(%arg0: i32) -> (i32, i32) {
    %c0_i32 = arith.constant 0 : i32
    %c0_i32_0 = arith.constant 0 : i32
    return %arg0, %c0_i32 : i32, i32
  }
  func.func @transform_1(%arg0: i32) -> (i32, i32) {
    %c0_i32 = arith.constant 0 : i32
    %c0_i32_0 = arith.constant 0 : i32
    %c0_i32_1 = arith.constant 0 : i32
    return %c0_i32, %c0_i32_0 : i32, i32
  }
  func.func @transform_2(%arg0: i32) -> (i32, i32) {
    %c0_i32 = arith.constant 0 : i32
    %c0_i32_0 = arith.constant 0 : i32
    %c0_i32_1 = arith.constant 0 : i32
    return %c0_i32, %c0_i32_0 : i32, i32
  }
  func.func @transform_3(%arg0: i32) -> (i32, i32) {
    %c0_i32 = arith.constant 0 : i32
    %c0_i32_0 = arith.constant 0 : i32
    return %arg0, %c0_i32 : i32, i32
  }
}

</mosaic_0001>

<llo_original>
// kernel: tpu_custom_call.1
$region0: #{tpu_custom_call.1}
  #allocation0 [shape = 'u32[]', space=smem, size = 0x4, offset = 0x4, fixed_abs, tag = 'smem constant byte address 0x4 - core index']
  #allocation1 [shape = 'u32[144,128]{1,0:T(1,128)}', space=vmem, size = 0x12000, scoped, tag = 'internal scratch']
  %s0 = inlined_call_operand.hbm [shape: bf16[8,32], index: 0, kind: input, shape index: {}]
  %s1 = inlined_call_operand.hbm [shape: bf16[32,32], index: 1, kind: input, shape index: {}]
  %s2 = inlined_call_operand.vmem [shape: f32[1,32], index: 2, kind: input, shape index: {}]
  %s3 = inlined_call_operand.hbm [shape: f32[8,32], index: 3, kind: output, shape index: {}]
  %s4 = sld [smem:[#allocation0]]
  $region30: #{tpu_custom_call.1} parent=0
    _
  %s6 = ssub.s32 1, %s4
  %s7 = scalar_select 0, %s6, %s4
  $region1: #{tpu_custom_call.1} parent=0
    #allocation2 [shape = 'u8[2048]{0}', space=vmem, size = 0x800, scoped, tag = 'input window, operand 0, single buffered']
    #allocation3 [shape = 's32[1]{0}', space=sflag, size = 0x4, scoped, tag = 'scoped memory for tpu_custom_call.1']
    #allocation4 [shape = 's32[1]{0}', space=sflag, size = 0x4, scoped, tag = 'scoped memory for tpu_custom_call.1']
    #allocation5 [shape = 'u8[8192]{0}', space=vmem, size = 0x2000, scoped, tag = 'input window, operand 1, single buffered']
    #allocation6 [shape = 's32[1]{0}', space=sflag, size = 0x4, scoped, tag = 'scoped memory for tpu_custom_call.1']
    #allocation7 [shape = 'u8[4096]{0}', space=vmem, size = 0x1000, scoped, tag = 'output window, operand 0, single buffered']
    %8 = vsyncpa [#allocation3], 0
    %9 = vsyncpa [#allocation6], 0
    %10 = vsyncpa [#allocation4], 0
    // Predicated region
    $region2: #{tpu_custom_call.1} parent=1 // pred_check
      _
    $region3: #{tpu_custom_call.1} parent=1 // pred_check_branch
      %12 = sbr.rel (0) target = $region5
    $region4: #{tpu_custom_call.1} parent=1 // pred_region
      %s14 = ssub.s32 64, 64
      %15 = vsyncadd [#allocation3], %s14
      %s17 = sshll.u32 [#allocation2], 4
      %s18 = int_to_ptr.vmem [resolvable:$true] %s17
      %20 = dma.hbm_to_vmem [thread:$0]  %s0, 64, %s18, [#allocation3]
    $region5: #{tpu_custom_call.1} parent=1 // pred_fallthru
      _
    // Predicated region
    $region6: #{tpu_custom_call.1} parent=1 // pred_check
      _
    $region7: #{tpu_custom_call.1} parent=1 // pred_check_branch
      %22 = sbr.rel (0) target = $region9
    $region8: #{tpu_custom_call.1} parent=1 // pred_region
      %s24 = ssub.s32 256, 256
      %25 = vsyncadd [#allocation6], %s24
      %s26 = sshll.u32 [#allocation5], 4
      %s27 = int_to_ptr.vmem [resolvable:$true] %s26
      %32 = dma.hbm_to_vmem [thread:$0]  %s1, 256, %s27, [#allocation6], 64, 64, 4
    $region9: #{tpu_custom_call.1} parent=1 // pred_fallthru
      _
    // Predicated region
    $region10: #{tpu_custom_call.1} parent=1 // pred_check
      _
    $region11: #{tpu_custom_call.1} parent=1 // pred_check_branch
      %34 = sbr.rel (0) target = $region13
    $region12: #{tpu_custom_call.1} parent=1 // pred_region
      _
    $region13: #{tpu_custom_call.1} parent=1 // pred_fallthru
      _
    // Predicated region
    $region14: #{tpu_custom_call.1} parent=1 // pred_check
      _
    $region15: #{tpu_custom_call.1} parent=1 // pred_check_branch
      %36 = sbr.rel (0) target = $region17
    $region16: #{tpu_custom_call.1} parent=1 // pred_region
      %37 = dma.done [#allocation3], 64
    $region17: #{tpu_custom_call.1} parent=1 // pred_fallthru
      _
    // Predicated region
    $region18: #{tpu_custom_call.1} parent=1 // pred_check
      _
    $region19: #{tpu_custom_call.1} parent=1 // pred_check_branch
      %39 = sbr.rel (0) target = $region21
    $region20: #{tpu_custom_call.1} parent=1 // pred_region
      %40 = dma.done [#allocation6], 256
    $region21: #{tpu_custom_call.1} parent=1 // pred_fallthru
      _
    %v42 = vld [vmem:[#allocation2] sm:$0xf]
    %v43 = vld [vmem:[#allocation5] sm:$0xf]
    %v44 = vld [vmem:[#allocation5 + $0x4] sm:$0xf]
    %v45 = vld [vmem:[#allocation5 + $0x8] sm:$0xf]
    %v46 = vld [vmem:[#allocation5 + $0xc] sm:$0xf]
    %v47 = vld [vmem:[%s2] sm:$0x1]
    %v49 = vlaneseq
    %v50 = vshrl.u32 %v49, 7
    %v51 = vsub.s32 0, %v50
    %v52 = vrot.slane %v47, %v51
    %v58 = vunpack.c.l.b16 %v43
    %v59 = vunpack.c.l.b16 %v44
    %v60 = vunpack.c.l.b16 %v45
    %v61 = vunpack.c.l.b16 %v46
    %v62 = vpack.c.b16 %v59, %v58
    %v63 = vpack.c.b16 %v61, %v60
    %vm66 = vcmask 261120
    %v68 = vsel %vm66, %v42, 0
    %70 = vmatprep.subr.bf16.mxu0 0
    %71 = vmatpush1.bf16.msra.mxu0 %v62
    %72 = vmatprep.subr.bf16.mxu0 0
    %73 = vmatpush1.bf16.msra.mxu0 %v63
    %74 = vmatprep.subr.bf16.mxu0 0
    %75 = vmatpush1.bf16.msra.mxu0 0
    %76 = vmatprep.subr.bf16.mxu0 0
    %77 = vmatpush1.bf16.msra.mxu0 0
    %78 = vmatprep.subr.bf16.mxu0 0
    %79 = vmatpush1.bf16.msra.mxu0 0
    %80 = vmatprep.subr.bf16.mxu0 0
    %81 = vmatpush1.bf16.msra.mxu0 0
    %82 = vmatprep.subr.bf16.mxu0 0
    %83 = vmatpush1.bf16.msra.mxu0 0
    %84 = vmatprep.subr.bf16.mxu0 0
    %85 = vmatpush1.bf16.msra.mxu0 0
    %86 = vmatprep.subr.bf16.mxu0 0
    %87 = vmatpush1.bf16.msra.mxu0 0
    %88 = vmatprep.subr.bf16.mxu0 0
    %89 = vmatpush1.bf16.msra.mxu0 0
    %90 = vmatprep.subr.bf16.mxu0 0
    %91 = vmatpush1.bf16.msra.mxu0 0
    %92 = vmatprep.subr.bf16.mxu0 0
    %93 = vmatpush1.bf16.msra.mxu0 0
    %94 = vmatprep.subr.bf16.mxu0 0
    %95 = vmatpush1.bf16.msra.mxu0 0
    %96 = vmatprep.subr.bf16.mxu0 0
    %97 = vmatpush1.bf16.msra.mxu0 0
    %98 = vmatprep.subr.bf16.mxu0 0
    %99 = vmatpush1.bf16.msra.mxu0 0
    %100 = vmatprep.subr.bf16.mxu0 0
    %101 = vmatpush1.bf16.msra.mxu0 0
    %102 = vmatprep.mubr.bf16.mxu0 0
    %103 = vmatmul.mubr.bf16.gmra.mrb[0].mxu0 %v68
    %v104 = vpop.f32.mrb[0].mxu0
    %v105 = vadd.f32 %v52, %v104
    %v106 = vpop.f32.mrb[0].mxu0
    %v107 = vpop.f32.mrb[0].mxu0
    %v108 = vpop.f32.mrb[0].mxu0
    %109 = vdwg.mxu0
    %v110 = vmax.f32 %v105, 0.0
    %111 = vst.msk [vmem:[#allocation7] sm:$0xff] %vm66, %v110
    // Predicated region
    $region22: #{tpu_custom_call.1} parent=1 // pred_check
      _
    $region23: #{tpu_custom_call.1} parent=1 // pred_check_branch
      %113 = sbr.rel (0) target = $region25
    $region24: #{tpu_custom_call.1} parent=1 // pred_region
      %s115 = ssub.s32 128, 128
      %116 = vsyncadd [#allocation4], %s115
      %s118 = sshll.u32 [#allocation7], 4
      %s119 = int_to_ptr.vmem [resolvable:$true] %s118
      %121 = dma.vmem_to_hbm [thread:$0]  %s119, 128, %s3, [#allocation4]
    $region25: #{tpu_custom_call.1} parent=1 // pred_fallthru
      _
    // Predicated region
    $region26: #{tpu_custom_call.1} parent=1 // pred_check
      _
    $region27: #{tpu_custom_call.1} parent=1 // pred_check_branch
      %123 = sbr.rel (0) target = $region29
    $region28: #{tpu_custom_call.1} parent=1 // pred_region
      %124 = dma.done [#allocation4], 128
    $region29: #{tpu_custom_call.1} parent=1 // pred_fallthru
      _
    %125 = vsyncpa [#allocation3], 1
    %126 = vsyncpa [#allocation6], 1
    %127 = vsyncpa [#allocation4], 1

</llo_original>
